<compile_context>
chip_gen: v7x
topology: tpu7x:2x2x1
jax: 0.10.0
libtpu: 0.0.40
codegen_flags: <defaults>
</compile_context>

<pallas_src>
import jax
import jax.numpy as jnp
from jax.experimental import pallas as pl
from jax.experimental.pallas import tpu as pltpu


def _add_relu_kernel(a_ref, b_ref, o_ref):
    # Fused elementwise add + relu on the current VMEM tile (pure VPU work).
    o_ref[...] = jnp.maximum(a_ref[...] + b_ref[...], 0)


_LANE = 1024  # lane-dense width (multiple of 128)


def add_relu(x268: jax.Array, x260: jax.Array) -> jax.Array:
    """Computes relu(x268 + x260) for same-shape inputs via a Pallas TPU kernel."""
    assert x268.shape == x260.shape
    assert x268.dtype == x260.dtype
    shape = x268.shape
    dtype = x268.dtype

    total = 1
    for d in shape:
        total *= d

    # Flatten to 1D; pad only the (rare) tail so the total is a multiple of LANE.
    a1 = x268.reshape(-1)
    b1 = x260.reshape(-1)
    pad = (-total) % _LANE
    if pad:
        a1 = jnp.pad(a1, (0, pad))
        b1 = jnp.pad(b1, (0, pad))
    total_p = total + pad
    rows = total_p // _LANE

    a2 = a1.reshape(rows, _LANE)
    b2 = b1.reshape(rows, _LANE)

    # Block sizing: ~2 MiB per operand (3 operands x 2 pipeline buffers = 12 MiB).
    itemsize = jnp.dtype(dtype).itemsize
    target_rows = max(8, (2 * 1024 * 1024) // (_LANE * itemsize))
    if rows <= target_rows:
        tile_rows = rows                      # full-extent block (legal even if not %8)
    else:
        tile_rows = (target_rows // 8) * 8    # multiple of 8 sublanes
    grid = (pl.cdiv(rows, tile_rows),)

    out2 = pl.pallas_call(
        _add_relu_kernel,
        out_shape=jax.ShapeDtypeStruct((rows, _LANE), dtype),
        grid_spec=pltpu.PrefetchScalarGridSpec(
            num_scalar_prefetch=0,
            grid=grid,
            in_specs=[
                pl.BlockSpec((tile_rows, _LANE), lambda i: (i, 0)),
                pl.BlockSpec((tile_rows, _LANE), lambda i: (i, 0)),
            ],
            out_specs=pl.BlockSpec((tile_rows, _LANE), lambda i: (i, 0)),
        ),
        compiler_params=pltpu.CompilerParams(
            dimension_semantics=("parallel",),
            vmem_limit_bytes=32 * 1024 * 1024,
        ),
        # Note: input_output_aliases={0: 0} could drop the output allocation if
        # the caller never reuses x268; left off to keep the wrapper general.
    )(a2, b2)

    out1 = out2.reshape(-1)
    if pad:
        out1 = out1[:total]
    return out1.reshape(shape)


if __name__ == "__main__":
    key = jax.random.PRNGKey(0)
    k1, k2, k3, k4 = jax.random.split(key, 4)

    # Small shape consistent with the module's forward (NCHW, same-shape inputs).
    N, C, H, W = 2, 4, 16, 16
    x268 = jax.random.normal(k1, (N, C, H, W), dtype=jnp.float32)
    x260 = jax.random.normal(k2, (N, C, H, W), dtype=jnp.float32)

    out = jax.block_until_ready(add_relu(x268, x260))
    ref = jnp.maximum(x268 + x260, 0.0)
    assert out.shape == (N, C, H, W)
    assert out.dtype == jnp.float32
    assert jnp.allclose(out, ref, atol=1e-6, rtol=1e-6)

    # Exercise the tail-padding path (element count not a multiple of 1024).
    y268 = jax.random.normal(k3, (2, 4, 14, 14), dtype=jnp.float32)
    y260 = jax.random.normal(k4, (2, 4, 14, 14), dtype=jnp.float32)
    out2 = jax.block_until_ready(add_relu(y268, y260))
    ref2 = jnp.maximum(y268 + y260, 0.0)
    assert jnp.allclose(out2, ref2, atol=1e-6, rtol=1e-6)

    print("KERNEL_OK")
</pallas_src>

<mosaic_0001>
module attributes {stable_mosaic.version = 11 : i64} {
  func.func @_add_relu_kernel(%arg0: i32, %arg1: memref<2x1024xf32, #tpu.memory_space<vmem>>, %arg2: memref<2x1024xf32, #tpu.memory_space<vmem>>, %arg3: memref<2x1024xf32, #tpu.memory_space<vmem>>) attributes {dimension_semantics = [#tpu.dimension_semantics<parallel>], iteration_bounds = array<i64: 1>, scalar_prefetch = 0 : i64, scratch_operands = 0 : i64, tpu.core_type = #tpu.core_type<tc>, window_params = [{transform_indices = @transform_0, window_bounds = array<i64: 2, 1024>}, {transform_indices = @transform_1, window_bounds = array<i64: 2, 1024>}, {transform_indices = @transform_2, window_bounds = array<i64: 2, 1024>}]} {
    %c0 = arith.constant 0 : index
    %c0_0 = arith.constant 0 : index
    %0 = vector.load %arg1[%c0, %c0_0] : memref<2x1024xf32, #tpu.memory_space<vmem>>, vector<2x1024xf32>
    %c0_1 = arith.constant 0 : index
    %c0_2 = arith.constant 0 : index
    %1 = vector.load %arg2[%c0_1, %c0_2] : memref<2x1024xf32, #tpu.memory_space<vmem>>, vector<2x1024xf32>
    %2 = arith.addf %0, %1 : vector<2x1024xf32>
    %cst = arith.constant 0.000000e+00 : f32
    %3 = vector.broadcast %cst : f32 to vector<2x1024xf32>
    %4 = arith.maximumf %2, %3 : vector<2x1024xf32>
    %c0_3 = arith.constant 0 : index
    %c0_4 = arith.constant 0 : index
    %5 = vector.load %arg3[%c0_3, %c0_4] : memref<2x1024xf32, #tpu.memory_space<vmem>>, vector<2x1024xf32>
    tpu.vector_store %arg3[%c0_3, %c0_4], %4 {strides = array<i32>} : memref<2x1024xf32, #tpu.memory_space<vmem>>, vector<2x1024xf32>,
    return
  }
  func.func @transform_0(%arg0: i32) -> (i32, i32) {
    %c0_i32 = arith.constant 0 : i32
    %c0_i32_0 = arith.constant 0 : i32
    return %arg0, %c0_i32 : i32, i32
  }
  func.func @transform_1(%arg0: i32) -> (i32, i32) {
    %c0_i32 = arith.constant 0 : i32
    %c0_i32_0 = arith.constant 0 : i32
    return %arg0, %c0_i32 : i32, i32
  }
  func.func @transform_2(%arg0: i32) -> (i32, i32) {
    %c0_i32 = arith.constant 0 : i32
    %c0_i32_0 = arith.constant 0 : i32
    return %arg0, %c0_i32 : i32, i32
  }
}

</mosaic_0001>

<llo_original>
// kernel: tpu_custom_call.1
$region0: #{tpu_custom_call.1}
  #allocation0 [shape = 'u32[]', space=smem, size = 0x4, offset = 0x4, fixed_abs, tag = 'smem constant byte address 0x4 - core index']
  #allocation1 [shape = 'u32[144,128]{1,0:T(1,128)}', space=vmem, size = 0x12000, scoped, tag = 'internal scratch']
  %s0 = inlined_call_operand.hbm [shape: f32[2,1024], index: 0, kind: input, shape index: {}]
  %s1 = inlined_call_operand.hbm [shape: f32[2,1024], index: 1, kind: input, shape index: {}]
  %s2 = inlined_call_operand.hbm [shape: f32[2,1024], index: 2, kind: output, shape index: {}]
  %s3 = sld [smem:[#allocation0]]
  $region26: #{tpu_custom_call.1} parent=0
    _
  %s5 = ssub.s32 1, %s3
  %s6 = scalar_select 0, %s5, %s3
  $region1: #{tpu_custom_call.1} parent=0
    #allocation2 [shape = 'u8[8192]{0}', space=vmem, size = 0x2000, scoped, tag = 'input window, operand 0, single buffered']
    #allocation3 [shape = 's32[1]{0}', space=sflag, size = 0x4, scoped, tag = 'scoped memory for tpu_custom_call.1']
    #allocation4 [shape = 's32[1]{0}', space=sflag, size = 0x4, scoped, tag = 'scoped memory for tpu_custom_call.1']
    #allocation5 [shape = 'u8[8192]{0}', space=vmem, size = 0x2000, scoped, tag = 'input window, operand 1, single buffered']
    #allocation6 [shape = 's32[1]{0}', space=sflag, size = 0x4, scoped, tag = 'scoped memory for tpu_custom_call.1']
    #allocation7 [shape = 'u8[8192]{0}', space=vmem, size = 0x2000, scoped, tag = 'output window, operand 0, single buffered']
    %7 = vsyncpa [#allocation3], 0
    %8 = vsyncpa [#allocation6], 0
    %9 = vsyncpa [#allocation4], 0
    // Predicated region
    $region2: #{tpu_custom_call.1} parent=1 // pred_check
      _
    $region3: #{tpu_custom_call.1} parent=1 // pred_check_branch
      %11 = sbr.rel (0) target = $region5
    $region4: #{tpu_custom_call.1} parent=1 // pred_region
      %s13 = ssub.s32 256, 256
      %14 = vsyncadd [#allocation3], %s13
      %s16 = sshll.u32 [#allocation2], 4
      %s17 = int_to_ptr.vmem [resolvable:$true] %s16
      %19 = dma.hbm_to_vmem [thread:$0]  %s0, 256, %s17, [#allocation3]
    $region5: #{tpu_custom_call.1} parent=1 // pred_fallthru
      _
    // Predicated region
    $region6: #{tpu_custom_call.1} parent=1 // pred_check
      _
    $region7: #{tpu_custom_call.1} parent=1 // pred_check_branch
      %21 = sbr.rel (0) target = $region9
    $region8: #{tpu_custom_call.1} parent=1 // pred_region
      %s23 = ssub.s32 256, 256
      %24 = vsyncadd [#allocation6], %s23
      %s26 = sshll.u32 [#allocation5], 4
      %s27 = int_to_ptr.vmem [resolvable:$true] %s26
      %29 = dma.hbm_to_vmem [thread:$0]  %s1, 256, %s27, [#allocation6]
    $region9: #{tpu_custom_call.1} parent=1 // pred_fallthru
      _
    // Predicated region
    $region10: #{tpu_custom_call.1} parent=1 // pred_check
      _
    $region11: #{tpu_custom_call.1} parent=1 // pred_check_branch
      %31 = sbr.rel (0) target = $region13
    $region12: #{tpu_custom_call.1} parent=1 // pred_region
      %32 = dma.done [#allocation3], 256
    $region13: #{tpu_custom_call.1} parent=1 // pred_fallthru
      _
    // Predicated region
    $region14: #{tpu_custom_call.1} parent=1 // pred_check
      _
    $region15: #{tpu_custom_call.1} parent=1 // pred_check_branch
      %34 = sbr.rel (0) target = $region17
    $region16: #{tpu_custom_call.1} parent=1 // pred_region
      %35 = dma.done [#allocation6], 256
    $region17: #{tpu_custom_call.1} parent=1 // pred_fallthru
      _
    %v36 = vld [vmem:[#allocation2] sm:$0xff]
    %v37 = vld [vmem:[#allocation2 + $0x8] sm:$0xff]
    %v38 = vld [vmem:[#allocation5] sm:$0xff]
    %v39 = vld [vmem:[#allocation5 + $0x8] sm:$0xff]
    %v40 = vadd.f32 %v36, %v38
    %v41 = vadd.f32 %v37, %v39
    %v42 = vmax.f32 %v40, 0.0
    %v43 = vmax.f32 %v41, 0.0
    %44 = vst [vmem:[#allocation7] sm:$0xff] %v42
    %45 = vst [vmem:[#allocation7 + $0x8] sm:$0xff] %v43
    // Predicated region
    $region18: #{tpu_custom_call.1} parent=1 // pred_check
      _
    $region19: #{tpu_custom_call.1} parent=1 // pred_check_branch
      %47 = sbr.rel (0) target = $region21
    $region20: #{tpu_custom_call.1} parent=1 // pred_region
      %s49 = ssub.s32 256, 256
      %50 = vsyncadd [#allocation4], %s49
      %s52 = sshll.u32 [#allocation7], 4
      %s53 = int_to_ptr.vmem [resolvable:$true] %s52
      %55 = dma.vmem_to_hbm [thread:$0]  %s53, 256, %s2, [#allocation4]
    $region21: #{tpu_custom_call.1} parent=1 // pred_fallthru
      _
    // Predicated region
    $region22: #{tpu_custom_call.1} parent=1 // pred_check
      _
    $region23: #{tpu_custom_call.1} parent=1 // pred_check_branch
      %57 = sbr.rel (0) target = $region25
    $region24: #{tpu_custom_call.1} parent=1 // pred_region
      %58 = dma.done [#allocation4], 256
    $region25: #{tpu_custom_call.1} parent=1 // pred_fallthru
      _
    %59 = vsyncpa [#allocation3], 1
    %60 = vsyncpa [#allocation6], 1
    %61 = vsyncpa [#allocation4], 1

</llo_original>
